<compile_context>
chip_gen: v7x
topology: tpu7x:2x2x1
jax: 0.10.0
libtpu: 0.0.40
codegen_flags: <defaults>
</compile_context>

<pallas_src>
import jax
import jax.numpy as jnp
from jax import lax
from jax.experimental import pallas as pl
from jax.experimental.pallas import tpu as pltpu


def _cdiv(a, b):
    return -(-a // b)


def _round_up(a, b):
    return _cdiv(a, b) * b


def _round_down(a, b):
    return (a // b) * b


def _choose_tiling(N, Cin, Ch, Cout, HW, itemsize):
    """Pick (bn images/step, tl lanes/step, n_chunks, cl chunk lanes).

    Goals:
      * ~4 MiB of in+out HBM traffic per grid step (amortize ~0.35us step
        overhead; measured data shows ~85%+ of HBM roofline needs MiB-scale
        blocks).
      * lane sub-chunks sized so live f32 x/h/y intermediates stay within
        ~48 vregs (no spills) regardless of channel counts.
      * double-buffered blocks comfortably inside v5e's 16 MiB scoped-VMEM
        default and v7x's 64 MiB physical VMEM.
      * >= 2 grid programs so the grid can shard across v7x's 2 TensorCores.
    """
    # In-kernel lane chunk: keep live f32 chunk intermediates <= ~48 vregs.
    sub = lambda c: _cdiv(c, 8)                       # sublane tiles per 128 lanes (f32)
    vregs_per_128 = sub(Cin) + sub(Ch) + sub(Cout)
    cl = _round_down(max(128, (48 * 128) // vregs_per_128), 128)
    cl = int(min(512, max(128, cl)))

    bytes_per_lane = (Cin + Cout) * itemsize          # in + out HBM bytes per lane
    target_lanes = max(cl, (4 << 20) // bytes_per_lane)   # ~4 MiB per step
    cap_lanes = max(cl, (8 << 20) // bytes_per_lane)      # VMEM-safety cap
    target_lanes = min(target_lanes, cap_lanes)

    if HW <= cl:
        tl, n_chunks, cl = HW, 1, HW                  # whole image in one chunk
    else:
        tl = min(_round_up(HW, cl), max(cl, _round_down(target_lanes, cl)))
        n_chunks = tl // cl

    # Multi-image blocking when HW is small; keep the static in-kernel image
    # loop modest (<= 32 unrolled bodies).
    bn = int(min(N, 32, max(1, target_lanes // tl)))

    # v7x: guarantee >= 2 programs along the parallel grid axes.
    if _cdiv(N, bn) * _cdiv(HW, tl) < 2:
        if N >= 2:
            bn = _cdiv(N, 2)
        elif HW > 2 * cl:
            tl = _round_up(_cdiv(HW, 2), cl)
            n_chunks = tl // cl

    return bn, tl, n_chunks, cl


def _make_mlp_kernel(bn, n_chunks, cl, ch, cout):
    """Kernel specialized on (images/block, chunk count, chunk lanes)."""

    def kernel(alpha_ref, x_ref, w1_ref, b1_ref, w2_ref, b2_ref, o_ref):
        # Single shared PReLU alpha (nn.PReLU() default, num_parameters=1).
        a = alpha_ref[0]
        w1 = w1_ref[...]                               # (Ch, Cin)  resident f32
        w2 = w2_ref[...]                               # (Cout, Ch) resident f32
        # Hoist bias broadcasts out of the chunk loop (JAX does not CSE
        # broadcast_in_dim; leaving it in-loop re-emits it every iteration).
        b1 = jnp.broadcast_to(b1_ref[...], (ch, cl))
        b2 = jnp.broadcast_to(b2_ref[...], (cout, cl))

        def do_chunk(b, lo):
            # NOTE: all dataflow here is strictly per-lane (the contraction is
            # over sublanes/channels only), which is what makes ragged image /
            # lane tiles safe: garbage padded lanes only produce garbage output
            # lanes that are clipped on writeback.  Do NOT add lane-axis
            # reductions or cross-lane ops without revisiting this.
            x = x_ref[b, :, pl.ds(lo, cl)]             # (Cin, cl), native dtype
            h = jnp.dot(w1, x, preferred_element_type=jnp.float32) + b1
            h = jnp.where(h > 0, h, a * h)             # PReLU (shared alpha)
            # TODO(synk): Dropout with drop > 0.0 (training mode) would need
            # pltpu.prng_seed / prng_random_bits masking with 1/(1-p) scaling;
            # the module default drop=0.0 (and eval mode) is the identity.
            y = jnp.dot(w2, h, preferred_element_type=jnp.float32) + b2
            o_ref[b, :, pl.ds(lo, cl)] = y.astype(o_ref.dtype)

        for b in range(bn):                            # small static image loop
            if n_chunks == 1:
                do_chunk(b, 0)
            else:
                def body(c, carry):
                    do_chunk(b, pl.multiple_of(c * cl, cl))
                    return carry
                lax.fori_loop(0, n_chunks, body, 0, unroll=min(8, n_chunks))

    return kernel


@jax.jit
def mlp_forward(x_nchw, w1, b1, w2, b2, alpha):
    """x_nchw: (N, Cin, H, W).  w1: (Ch, Cin), b1: (Ch,), w2: (Cout, Ch), b2: (Cout,).

    Weights are in Conv2d (out_channels, in_channels) layout (kernel_size=1).
    Returns (N, Cout, H, W), matching the PyTorch Mlp forward.
    """
    N, Cin, H, W = x_nchw.shape
    Ch = w1.shape[0]
    Cout = w2.shape[0]
    HW = H * W
    itemsize = jnp.dtype(x_nchw.dtype).itemsize

    bn, tl, n_chunks, cl = _choose_tiling(N, Cin, Ch, Cout, HW, itemsize)
    grid = (_cdiv(N, bn), _cdiv(HW, tl))

    # Pure reshape — no NCHW<->NHWC transpose, no padding copy.
    x3 = x_nchw.reshape(N, Cin, HW)

    # Tiny weights/biases stay f32 and fully resident across the grid.
    w1f = w1.astype(jnp.float32)
    w2f = w2.astype(jnp.float32)
    b1c = b1.reshape(Ch, 1).astype(jnp.float32)
    b2c = b2.reshape(Cout, 1).astype(jnp.float32)
    alpha1 = alpha.reshape(1).astype(jnp.float32)

    # Explicit VMEM budget (double-buffered in+out blocks + headroom); stays
    # under v5e's 16 MiB scoped default only by accident otherwise, and well
    # under v7x's 64 MiB physical VMEM here.
    block_bytes = bn * tl * (Cin + Cout) * itemsize
    vmem_limit = int(min(96 << 20, max(24 << 20, 4 * block_bytes + (4 << 20))))

    out3 = pl.pallas_call(
        _make_mlp_kernel(bn, n_chunks, cl, Ch, Cout),
        out_shape=jax.ShapeDtypeStruct((N, Cout, HW), x_nchw.dtype),
        grid_spec=pltpu.PrefetchScalarGridSpec(
            num_scalar_prefetch=0,
            grid=grid,
            in_specs=[
                # PReLU alpha scalar lives in SMEM (full array, untiled).
                pl.BlockSpec(memory_space=pltpu.MemorySpace.SMEM),
                # Activations: bn images, all channels (sublanes), lane tile.
                pl.BlockSpec((bn, Cin, tl), lambda n, j: (n, 0, j)),
                # Weights / biases: tiny, resident across the whole grid.
                pl.BlockSpec((Ch, Cin), lambda n, j: (0, 0)),
                pl.BlockSpec((Ch, 1), lambda n, j: (0, 0)),
                pl.BlockSpec((Cout, Ch), lambda n, j: (0, 0)),
                pl.BlockSpec((Cout, 1), lambda n, j: (0, 0)),
            ],
            out_specs=pl.BlockSpec((bn, Cout, tl), lambda n, j: (n, 0, j)),
        ),
        compiler_params=pltpu.CompilerParams(
            # Both grid axes are embarrassingly parallel (shards across the
            # 2 TensorCores on v7x; no-op on v5e/v6e).
            dimension_semantics=("parallel", "parallel"),
            vmem_limit_bytes=vmem_limit,
        ),
    )(alpha1, x3, w1f, b1c, w2f, b2c)

    # (N, Cout, HW) -> (N, Cout, H, W): pure reshape, no transpose.
    return out3.reshape(N, Cout, H, W)


def mlp_reference(x_nchw, w1, b1, w2, b2, alpha):
    """Pure-JAX reference mirroring the PyTorch forward (NCHW throughout)."""
    x = x_nchw.astype(jnp.float32)
    h = jnp.einsum("oc,nchw->nohw", w1.astype(jnp.float32), x)
    h = h + b1[None, :, None, None]
    h = jnp.where(h > 0, h, alpha * h)
    y = jnp.einsum("oc,nchw->nohw", w2.astype(jnp.float32), h)
    y = y + b2[None, :, None, None]
    return y.astype(x_nchw.dtype)


def _run_case(key, N, Cin, Ch, Cout, H, W):
    kx, kw1, kb1, kw2, kb2 = jax.random.split(key, 5)
    x = jax.random.normal(kx, (N, Cin, H, W), dtype=jnp.float32)
    # Conv2d(k=1) weights in (out_channels, in_channels) layout.
    w1 = jax.random.normal(kw1, (Ch, Cin), dtype=jnp.float32) * 0.1
    b1 = jax.random.normal(kb1, (Ch,), dtype=jnp.float32) * 0.1
    w2 = jax.random.normal(kw2, (Cout, Ch), dtype=jnp.float32) * 0.1
    b2 = jax.random.normal(kb2, (Cout,), dtype=jnp.float32) * 0.1
    alpha = jnp.array(0.25, dtype=jnp.float32)  # nn.PReLU() default init

    out = jax.block_until_ready(mlp_forward(x, w1, b1, w2, b2, alpha))
    ref = mlp_reference(x, w1, b1, w2, b2, alpha)
    assert out.shape == (N, Cout, H, W), out.shape
    err = float(jnp.max(jnp.abs(out - ref)))
    assert jnp.allclose(out, ref, atol=1e-5, rtol=1e-5), err


if __name__ == "__main__":
    key = jax.random.PRNGKey(0)
    k1, k2 = jax.random.split(key, 2)

    # Small shapes consistent with the module: batch=2, in=4, hidden=8, out=4.
    # Case 1: 16x16 spatial (HW=256 -> single-chunk, multi-image-capable path).
    _run_case(k1, N=2, Cin=4, Ch=8, Cout=4, H=16, W=16)
    # Case 2: 48x48 spatial (HW=2304 -> in-kernel lane-chunk loop + ragged tile).
    _run_case(k2, N=2, Cin=4, Ch=8, Cout=4, H=48, W=48)

    print("KERNEL_OK")
</pallas_src>

<mosaic_0001>
module attributes {stable_mosaic.version = 11 : i64} {
  func.func @kernel(%arg0: i32, %arg1: i32, %arg2: memref<1xf32, #tpu.memory_space<smem>>, %arg3: memref<1x4x256xf32, #tpu.memory_space<vmem>>, %arg4: memref<8x4xf32, #tpu.memory_space<vmem>>, %arg5: memref<8x1xf32, #tpu.memory_space<vmem>>, %arg6: memref<4x8xf32, #tpu.memory_space<vmem>>, %arg7: memref<4x1xf32, #tpu.memory_space<vmem>>, %arg8: memref<1x4x256xf32, #tpu.memory_space<vmem>>) attributes {dimension_semantics = [#tpu.dimension_semantics<parallel>, #tpu.dimension_semantics<parallel>], iteration_bounds = array<i64: 2, 1>, scalar_prefetch = 0 : i64, scratch_operands = 0 : i64, tpu.core_type = #tpu.core_type<tc>, window_params = [{transform_indices = @transform_0, window_bounds = array<i64: 1>}, {transform_indices = @transform_1, window_bounds = array<i64: 1, 4, 256>}, {pipeline_mode = #tpu.pipeline_mode<synchronous>, transform_indices = @transform_2, window_bounds = array<i64: 8, 4>}, {pipeline_mode = #tpu.pipeline_mode<synchronous>, transform_indices = @transform_3, window_bounds = array<i64: 8, 1>}, {pipeline_mode = #tpu.pipeline_mode<synchronous>, transform_indices = @transform_4, window_bounds = array<i64: 4, 8>}, {pipeline_mode = #tpu.pipeline_mode<synchronous>, transform_indices = @transform_5, window_bounds = array<i64: 4, 1>}, {transform_indices = @transform_6, window_bounds = array<i64: 1, 4, 256>}]} {
    %c0 = arith.constant 0 : index
    %0 = memref.load %arg2[%c0] : memref<1xf32, #tpu.memory_space<smem>>
    %c0_0 = arith.constant 0 : index
    %c0_1 = arith.constant 0 : index
    %1 = vector.load %arg4[%c0_0, %c0_1] : memref<8x4xf32, #tpu.memory_space<vmem>>, vector<8x4xf32>
    %c0_2 = arith.constant 0 : index
    %c0_3 = arith.constant 0 : index
    %2 = vector.load %arg6[%c0_2, %c0_3] : memref<4x8xf32, #tpu.memory_space<vmem>>, vector<4x8xf32>
    %c0_4 = arith.constant 0 : index
    %c0_5 = arith.constant 0 : index
    %3 = vector.load %arg5[%c0_4, %c0_5] : memref<8x1xf32, #tpu.memory_space<vmem>>, vector<8x1xf32>
    %4 = vector.shape_cast %3 : vector<8x1xf32> to vector<8x1xf32>
    %5 = vector.broadcast %4 : vector<8x1xf32> to vector<8x256xf32>
    %c0_6 = arith.constant 0 : index
    %c0_7 = arith.constant 0 : index
    %6 = vector.load %arg7[%c0_6, %c0_7] : memref<4x1xf32, #tpu.memory_space<vmem>>, vector<4x1xf32>
    %7 = vector.shape_cast %6 : vector<4x1xf32> to vector<4x1xf32>
    %8 = vector.broadcast %7 : vector<4x1xf32> to vector<4x256xf32>
    %c0_8 = arith.constant 0 : index
    %c0_9 = arith.constant 0 : index
    %c0_10 = arith.constant 0 : index
    %9 = vector.load %arg3[%c0_8, %c0_9, %c0_10] : memref<1x4x256xf32, #tpu.memory_space<vmem>>, vector<1x4x256xf32>
    %10 = vector.shape_cast %9 : vector<1x4x256xf32> to vector<4x256xf32>
    %cst = arith.constant dense<0.000000e+00> : vector<8x256xf32>
    %11 = tpu.matmul %1, %10, %cst {dimension_numbers = #tpu.dot_dimension_numbers<[1], [0], [0], [1], [0, 0, 1, 1], [], []>} : vector<8x4xf32>, vector<4x256xf32>, vector<8x256xf32> -> vector<8x256xf32>
    %12 = arith.addf %11, %5 : vector<8x256xf32>
    %cst_11 = arith.constant 0.000000e+00 : f32
    %13 = vector.broadcast %cst_11 : f32 to vector<8x256xf32>
    %14 = arith.cmpf ogt, %12, %13 : vector<8x256xf32>
    %15 = vector.broadcast %0 : f32 to vector<8x256xf32>
    %16 = arith.mulf %15, %12 : vector<8x256xf32>
    %17 = arith.select %14, %12, %16 : vector<8x256xi1>, vector<8x256xf32>
    %cst_12 = arith.constant dense<0.000000e+00> : vector<4x256xf32>
    %18 = tpu.matmul %2, %17, %cst_12 {dimension_numbers = #tpu.dot_dimension_numbers<[1], [0], [0], [1], [0, 0, 1, 1], [], []>} : vector<4x8xf32>, vector<8x256xf32>, vector<4x256xf32> -> vector<4x256xf32>
    %19 = arith.addf %18, %8 : vector<4x256xf32>
    %c0_13 = arith.constant 0 : index
    %c0_14 = arith.constant 0 : index
    %c0_15 = arith.constant 0 : index
    %20 = vector.load %arg8[%c0_13, %c0_14, %c0_15] : memref<1x4x256xf32, #tpu.memory_space<vmem>>, vector<1x4x256xf32>
    %21 = vector.shape_cast %20 : vector<1x4x256xf32> to vector<4x256xf32>
    %22 = vector.shape_cast %19 : vector<4x256xf32> to vector<1x4x256xf32>
    tpu.vector_store %arg8[%c0_13, %c0_14, %c0_15], %22 {strides = array<i32>} : memref<1x4x256xf32, #tpu.memory_space<vmem>>, vector<1x4x256xf32>,
    return
  }
  func.func @transform_0(%arg0: i32, %arg1: i32) -> i32 {
    %c0_i32 = arith.constant 0 : i32
    %c0_i32_0 = arith.constant 0 : i32
    return %c0_i32 : i32
  }
  func.func @transform_1(%arg0: i32, %arg1: i32) -> (i32, i32, i32) {
    %c0_i32 = arith.constant 0 : i32
    %c0_i32_0 = arith.constant 0 : i32
    return %arg0, %c0_i32, %arg1 : i32, i32, i32
  }
  func.func @transform_2(%arg0: i32, %arg1: i32) -> (i32, i32) {
    %c0_i32 = arith.constant 0 : i32
    %c0_i32_0 = arith.constant 0 : i32
    %c0_i32_1 = arith.constant 0 : i32
    return %c0_i32, %c0_i32_0 : i32, i32
  }
  func.func @transform_3(%arg0: i32, %arg1: i32) -> (i32, i32) {
    %c0_i32 = arith.constant 0 : i32
    %c0_i32_0 = arith.constant 0 : i32
    %c0_i32_1 = arith.constant 0 : i32
    return %c0_i32, %c0_i32_0 : i32, i32
  }
  func.func @transform_4(%arg0: i32, %arg1: i32) -> (i32, i32) {
    %c0_i32 = arith.constant 0 : i32
    %c0_i32_0 = arith.constant 0 : i32
    %c0_i32_1 = arith.constant 0 : i32
    return %c0_i32, %c0_i32_0 : i32, i32
  }
  func.func @transform_5(%arg0: i32, %arg1: i32) -> (i32, i32) {
    %c0_i32 = arith.constant 0 : i32
    %c0_i32_0 = arith.constant 0 : i32
    %c0_i32_1 = arith.constant 0 : i32
    return %c0_i32, %c0_i32_0 : i32, i32
  }
  func.func @transform_6(%arg0: i32, %arg1: i32) -> (i32, i32, i32) {
    %c0_i32 = arith.constant 0 : i32
    %c0_i32_0 = arith.constant 0 : i32
    return %arg0, %c0_i32, %arg1 : i32, i32, i32
  }
}

</mosaic_0001>

<llo_original>
// kernel: mlp_forward.1
$region0: #{mlp_forward.1}
  #allocation0 [shape = 'u32[]', space=smem, size = 0x4, offset = 0x4, fixed_abs, tag = 'smem constant byte address 0x4 - core index']
  #allocation1 [shape = 'u32[144,128]{1,0:T(1,128)}', space=vmem, size = 0x12000, scoped, tag = 'internal scratch']
  #allocation2 [shape = 'f32[1]{0:T(128)S(6)}', space=smem, size = 0x200, scoped, tag = 'scoped memory for mlp_forward.1']
  %s0 = inlined_call_operand.<no memory space> [shape: f32[1], index: 0, kind: input, shape index: {}]
  %s1 = inlined_call_operand.vmem [shape: f32[2,4,256], index: 1, kind: input, shape index: {}]
  %s2 = inlined_call_operand.vmem [shape: f32[8,4], index: 2, kind: input, shape index: {}]
  %s3 = inlined_call_operand.vmem [shape: f32[8,1], index: 3, kind: input, shape index: {}]
  %s4 = inlined_call_operand.vmem [shape: f32[4,8], index: 4, kind: input, shape index: {}]
  %s5 = inlined_call_operand.vmem [shape: f32[4,1], index: 5, kind: input, shape index: {}]
  %s6 = inlined_call_operand.vmem [shape: f32[2,4,256], index: 6, kind: output, shape index: {}]
  %s7 = sld [smem:[#allocation0]]
  $region57: #{mlp_forward.1} parent=0
    _
  %s9 = ssub.s32 1, %s7
  %s10 = scalar_select 0, %s9, %s7
  %11 = sst [smem:[#allocation2]] %s0
  loop: start=0, step=1, limit=4
  $region2: #{mlp_forward.1} parent=0 // loop_pre_header
    _
  $region3: #{mlp_forward.1} parent=0 // loop_header
    %s13 = sphi 0, %s17
    %p14 = scmp.ge.s32.totalorder %s13, 4
    %s20 = sphi 0, %s32
    %s21 = sphi 0, %s28
    %s22 = sphi 0, %s20
    %s23 = sphi 0, %s21
    %s24 = sphi 0, %s22
    %s25 = sphi 0, %s23
    %s33 = sphi 0, %s33
    %s35 = sphi 0, %s33
    %s36 = sphi 0, %s35
    %s50 = sphi 0, %s36
    %s58 = sphi 0, %s60
    %s61 = sphi 0, %s58
    %s62 = sphi 0, %s61
    %s78 = sphi 0, %s62
    %s82 = sphi 0, %s82
    %s84 = sphi 0, %s82
    %s85 = sphi 0, %s84
    %s99 = sphi 0, %s85
    %s103 = sphi 0, %s103
    %s105 = sphi 0, %s103
    %s106 = sphi 0, %s105
    %s120 = sphi 0, %s106
    %s124 = sphi 0, %s124
    %s126 = sphi 0, %s124
    %s127 = sphi 0, %s126
    %s141 = sphi 0, %s127
    %s145 = sphi 0, %s145
    %s147 = sphi 0, %s145
    %s148 = sphi 0, %s147
    %s162 = sphi 0, %s148
    %s170 = sphi 0, %s172
    %s173 = sphi 0, %s170
    %s174 = sphi 0, %s173
    %s190 = sphi 0, %s174
  $region4: #{mlp_forward.1} parent=0 // loop_header_branch
    %16 = sbr.rel (%p14) target = $region8
  $region5: #{mlp_forward.1} parent=0 // loop_body
    %s18 = ssub.s32 %s13, 1
    %s19 = ssub.s32 %s13, 2
    %s26 = sadd.s32 1, %s21
    %p27 = scmp.ge.s32.totalorder %s26, 1
    %s28 = scalar_select %p27, 0, %s26
    %s29 = sadd.s32 1, %s20
    %s30 = scalar_select %p27, %s29, %s20
    %p31 = scmp.ge.s32.totalorder %s30, 2
    %s32 = scalar_select %p31, 0, %s30
    %s34 = sadd.s32 %s33, 1
    %p37 = scmp.eq.s32.totalorder %s13, 1
    %p38 = scmp.ne.s32.totalorder %s33, %s35
    %p39 = scmp.eq.s32.totalorder %s13, 0
    %p40 = por %p38, %p39
    %p41 = scmp.ne.s32.totalorder %s33, %s35
    %p42 = scmp.eq.s32.totalorder %s18, 1
    %p43 = por %p41, %p42
    %p44 = scmp.ne.s32.totalorder %s35, %s36
    %p45 = scmp.eq.s32.totalorder %s18, 0
    %p46 = por %p44, %p45
    %p47 = scmp.ne.s32.totalorder %s35, %s36
    %p48 = scmp.eq.s32.totalorder %s19, 1
    %p49 = por %p47, %p48
    %p51 = scmp.ne.s32.totalorder %s36, %s50
    %p52 = scmp.eq.s32.totalorder %s19, 0
    %p53 = por %p51, %p52
    %s54 = ssub.s32 %s20, %s32
    %s55 = ssub.s32 %s21, %s28
    %s56 = sor.u32 %s54, %s55
    %p57 = scmp.eq.s32.totalorder %s56, 0
    %s59 = sadd.s32 %s58, 1
    %s60 = scalar_select %p57, %s58, %s59
    %p63 = pneg %p57
    %p64 = scmp.eq.s32.totalorder %s13, 1
    %p65 = por %p63, %p64
    %p66 = scmp.ne.s32.totalorder %s58, %s61
    %p67 = scmp.eq.s32.totalorder %s13, 0
    %p68 = por %p66, %p67
    %p69 = scmp.ne.s32.totalorder %s58, %s61
    %p70 = scmp.eq.s32.totalorder %s18, 1
    %p71 = por %p69, %p70
    %p72 = scmp.ne.s32.totalorder %s61, %s62
    %p73 = scmp.eq.s32.totalorder %s18, 0
    %p74 = por %p72, %p73
    %p75 = scmp.ne.s32.totalorder %s61, %s62
    %p76 = scmp.eq.s32.totalorder %s19, 1
    %p77 = por %p75, %p76
    %p79 = scmp.ne.s32.totalorder %s62, %s78
    %p80 = scmp.eq.s32.totalorder %s19, 0
    %p81 = por %p79, %p80
    %s83 = sadd.s32 %s82, 1
    %p86 = scmp.eq.s32.totalorder %s13, 1
    %p87 = scmp.ne.s32.totalorder %s82, %s84
    %p88 = scmp.eq.s32.totalorder %s13, 0
    %p89 = por %p87, %p88
    %p90 = scmp.ne.s32.totalorder %s82, %s84
    %p91 = scmp.eq.s32.totalorder %s18, 1
    %p92 = por %p90, %p91
    %p93 = scmp.ne.s32.totalorder %s84, %s85
    %p94 = scmp.eq.s32.totalorder %s18, 0
    %p95 = por %p93, %p94
    %p96 = scmp.ne.s32.totalorder %s84, %s85
    %p97 = scmp.eq.s32.totalorder %s19, 1
    %p98 = por %p96, %p97
    %p100 = scmp.ne.s32.totalorder %s85, %s99
    %p101 = scmp.eq.s32.totalorder %s19, 0
    %p102 = por %p100, %p101
    %s104 = sadd.s32 %s103, 1
    %p107 = scmp.eq.s32.totalorder %s13, 1
    %p108 = scmp.ne.s32.totalorder %s103, %s105
    %p109 = scmp.eq.s32.totalorder %s13, 0
    %p110 = por %p108, %p109
    %p111 = scmp.ne.s32.totalorder %s103, %s105
    %p112 = scmp.eq.s32.totalorder %s18, 1
    %p113 = por %p111, %p112
    %p114 = scmp.ne.s32.totalorder %s105, %s106
    %p115 = scmp.eq.s32.totalorder %s18, 0
    %p116 = por %p114, %p115
    %p117 = scmp.ne.s32.totalorder %s105, %s106
    %p118 = scmp.eq.s32.totalorder %s19, 1
    %p119 = por %p117, %p118
    %p121 = scmp.ne.s32.totalorder %s106, %s120
    %p122 = scmp.eq.s32.totalorder %s19, 0
    %p123 = por %p121, %p122
    %s125 = sadd.s32 %s124, 1
    %p128 = scmp.eq.s32.totalorder %s13, 1
    %p129 = scmp.ne.s32.totalorder %s124, %s126
    %p130 = scmp.eq.s32.totalorder %s13, 0
    %p131 = por %p129, %p130
    %p132 = scmp.ne.s32.totalorder %s124, %s126
    %p133 = scmp.eq.s32.totalorder %s18, 1
    %p134 = por %p132, %p133
    %p135 = scmp.ne.s32.totalorder %s126, %s127
    %p136 = scmp.eq.s32.totalorder %s18, 0
    %p137 = por %p135, %p136
    %p138 = scmp.ne.s32.totalorder %s126, %s127
    %p139 = scmp.eq.s32.totalorder %s19, 1
    %p140 = por %p138, %p139
    %p142 = scmp.ne.s32.totalorder %s127, %s141
    %p143 = scmp.eq.s32.totalorder %s19, 0
    %p144 = por %p142, %p143
    %s146 = sadd.s32 %s145, 1
    %p149 = scmp.eq.s32.totalorder %s13, 1
    %p150 = scmp.ne.s32.totalorder %s145, %s147
    %p151 = scmp.eq.s32.totalorder %s13, 0
    %p152 = por %p150, %p151
    %p153 = scmp.ne.s32.totalorder %s145, %s147
    %p154 = scmp.eq.s32.totalorder %s18, 1
    %p155 = por %p153, %p154
    %p156 = scmp.ne.s32.totalorder %s147, %s148
    %p157 = scmp.eq.s32.totalorder %s18, 0
    %p158 = por %p156, %p157
    %p159 = scmp.ne.s32.totalorder %s147, %s148
    %p160 = scmp.eq.s32.totalorder %s19, 1
    %p161 = por %p159, %p160
    %p163 = scmp.ne.s32.totalorder %s148, %s162
    %p164 = scmp.eq.s32.totalorder %s19, 0
    %p165 = por %p163, %p164
    %s166 = ssub.s32 %s20, %s32
    %s167 = ssub.s32 %s21, %s28
    %s168 = sor.u32 %s166, %s167
    %p169 = scmp.eq.s32.totalorder %s168, 0
    %s171 = sadd.s32 %s170, 1
    %s172 = scalar_select %p169, %s170, %s171
    %p175 = pneg %p169
    %p176 = scmp.eq.s32.totalorder %s13, 1
    %p177 = por %p175, %p176
    %p178 = scmp.ne.s32.totalorder %s170, %s173
    %p179 = scmp.eq.s32.totalorder %s13, 0
    %p180 = por %p178, %p179
    %p181 = scmp.ne.s32.totalorder %s170, %s173
    %p182 = scmp.eq.s32.totalorder %s18, 1
    %p183 = por %p181, %p182
    %p184 = scmp.ne.s32.totalorder %s173, %s174
    %p185 = scmp.eq.s32.totalorder %s18, 0
    %p186 = por %p184, %p185
    %p187 = scmp.ne.s32.totalorder %s173, %s174
    %p188 = scmp.eq.s32.totalorder %s19, 1
    %p189 = por %p187, %p188
    %p191 = scmp.ne.s32.totalorder %s174, %s190
    %p192 = scmp.eq.s32.totalorder %s19, 0
    %p193 = por %p191, %p192
    %p194 = scmp.le.s32.totalorder 1, %s13
    %p195 = scmp.lt.s32.totalorder %s13, 3
    %p196 = pnand %p194, %p195
    %p197 = pneg %p196
    // Predicated region
    $region9: #{mlp_forward.1} parent=5 // pred_check
      _
    $region10: #{mlp_forward.1} parent=5 // pred_check_branch
      %199 = sbr.rel (%p196) target = $region12
    $region11: #{mlp_forward.1} parent=5 // pred_region
      %s200 = ssub.s32 %s13, 1
      // Predicated region
      $region13: #{mlp_forward.1} parent=11 // pred_check
        %p201 = pneg %p46
      $region14: #{mlp_forward.1} parent=11 // pred_check_branch
        %203 = sbr.rel (%p201) target = $region16
      $region15: #{mlp_forward.1} parent=11 // pred_region
        _
      $region16: #{mlp_forward.1} parent=11 // pred_fallthru
        _
      // Predicated region
      $region17: #{mlp_forward.1} parent=11 // pred_check
        %p204 = pneg %p95
      $region18: #{mlp_forward.1} parent=11 // pred_check_branch
        %206 = sbr.rel (%p204) target = $region20
      $region19: #{mlp_forward.1} parent=11 // pred_region
        _
      $region20: #{mlp_forward.1} parent=11 // pred_fallthru
        _
      // Predicated region
      $region21: #{mlp_forward.1} parent=11 // pred_check
        %p207 = pneg %p116
      $region22: #{mlp_forward.1} parent=11 // pred_check_branch
        %209 = sbr.rel (%p207) target = $region24
      $region23: #{mlp_forward.1} parent=11 // pred_region
        _
      $region24: #{mlp_forward.1} parent=11 // pred_fallthru
        _
      // Predicated region
      $region25: #{mlp_forward.1} parent=11 // pred_check
        %p210 = pneg %p137
      $region26: #{mlp_forward.1} parent=11 // pred_check_branch
        %212 = sbr.rel (%p210) target = $region28
      $region27: #{mlp_forward.1} parent=11 // pred_region
        _
      $region28: #{mlp_forward.1} parent=11 // pred_fallthru
        _
      // Predicated region
      $region29: #{mlp_forward.1} parent=11 // pred_check
        %p213 = pneg %p158
      $region30: #{mlp_forward.1} parent=11 // pred_check_branch
        %215 = sbr.rel (%p213) target = $region32
      $region31: #{mlp_forward.1} parent=11 // pred_region
        _
      $region32: #{mlp_forward.1} parent=11 // pred_fallthru
        _
    $region12: #{mlp_forward.1} parent=5 // pred_fallthru
      _
    %p216 = scmp.lt.s32.totalorder %s13, 2
    // Predicated region
    $region33: #{mlp_forward.1} parent=5 // pred_check
      %p217 = pneg %p216
    $region34: #{mlp_forward.1} parent=5 // pred_check_branch
      %219 = sbr.rel (%p217) target = $region36
    $region35: #{mlp_forward.1} parent=5 // pred_region
      // Predicated region
      $region37: #{mlp_forward.1} parent=35 // pred_check
        %p220 = pneg %p68
      $region38: #{mlp_forward.1} parent=35 // pred_check_branch
        %222 = sbr.rel (%p220) target = $region40
      $region39: #{mlp_forward.1} parent=35 // pred_region
        %s223 = smul.u32 2, %s21
        %p224 = scmp.lt.s32.totalorder %s20, 1
        %s225 = scalar_select %p224, %s20, 1
        %p226 = scmp.lt.s32.totalorder %s223, 1
        %s227 = scalar_select %p226, %s223, 1
        %s228 = smul.addr %s225, 2
        %s229 = sadd.s32 %s227, %s228
        %s230 = smul.addr %s229, 4
        %s231 = scalar_lea.vmem %s1, %s230
        %s232 = smul.u32 2, %s21
      $region40: #{mlp_forward.1} parent=35 // pred_fallthru
        _
    $region36: #{mlp_forward.1} parent=5 // pred_fallthru
      _
    %p233 = scmp.le.s32.totalorder 1, %s13
    %p234 = scmp.lt.s32.totalorder %s13, 3
    %p235 = pnand %p233, %p234
    %p236 = pneg %p235
    // Predicated region
    $region41: #{mlp_forward.1} parent=5 // pred_check
      _
    $region42: #{mlp_forward.1} parent=5 // pred_check_branch
      %238 = sbr.rel (%p235) target = $region44
    $region43: #{mlp_forward.1} parent=5 // pred_region
      %s239 = ssub.s32 %s13, 1
      %p240 = pneg %p46
      %p241 = pneg %p43
      %s242 = smul.u32 2, %s23
      %p243 = scmp.lt.s32.totalorder %s22, 1
      %s244 = scalar_select %p243, %s22, 1
      %p245 = scmp.lt.s32.totalorder %s242, 1
      %s246 = scalar_select %p245, %s242, 1
      %s247 = smul.addr %s244, 2
      %s248 = sadd.s32 %s246, %s247
      %s249 = smul.addr %s248, 4
      %s250 = scalar_lea.vmem %s1, %s249
      %p251 = pneg %p74
      %p252 = pneg %p71
      %p253 = pneg %p95
      %p254 = pneg %p92
      %p255 = pneg %p116
      %p256 = pneg %p113
      %p257 = pneg %p137
      %p258 = pneg %p134
      %p259 = pneg %p158
      %p260 = pneg %p155
      %p261 = pneg %p186
      %p262 = pneg %p183
      %s263 = smul.u32 2, %s23
      %p264 = scmp.lt.s32.totalorder %s22, 1
      %s265 = scalar_select %p264, %s22, 1
      %p266 = scmp.lt.s32.totalorder %s263, 1
      %s267 = scalar_select %p266, %s263, 1
      %s268 = smul.addr %s265, 2
      %s269 = sadd.s32 %s267, %s268
      %s270 = smul.addr %s269, 4
      %s271 = scalar_lea.vmem %s6, %s270
      %s272 = smul.u32 2, %s23
      %p273 = scmp.lt.s32.totalorder %s22, 1
      %s274 = scalar_select %p273, %s22, 1
      %p275 = scmp.lt.s32.totalorder %s272, 1
      %s276 = scalar_select %p275, %s272, 1
      %s277 = smul.addr %s274, 2
      %s278 = sadd.s32 %s276, %s277
      %s279 = smul.addr %s278, 4
      %s280 = scalar_lea.vmem %s1, %s279
      %s281 = smul.u32 2, %s23
      %s282 = smul.u32 2, %s23
      %p283 = scmp.lt.s32.totalorder %s22, 1
      %s284 = scalar_select %p283, %s22, 1
      %p285 = scmp.lt.s32.totalorder %s282, 1
      %s286 = scalar_select %p285, %s282, 1
      %s287 = smul.addr %s284, 2
      %s288 = sadd.s32 %s286, %s287
      %s289 = smul.addr %s288, 4
      %s290 = scalar_lea.vmem %s6, %s289
      %s291 = smul.u32 2, %s23
      %s292 = sld [smem:[#allocation2]]
      %v293 = vld [vmem:[%s2] sm:$0xff]
      %v294 = vld [vmem:[%s4] sm:$0xf]
      %v295 = vld [vmem:[%s3] sm:$0xff]
      %297 = vset.pattern.permute.xlu0 0
      %298 = vperm.xlu0 %297, %v295
      %v299 = vpop.permute.xlu0 %298
      %v301 = vld [vmem:[%s5] sm:$0xf]
      %303 = vset.pattern.permute.xlu0 0
      %304 = vperm.xlu0 %303, %v301
      %v305 = vpop.permute.xlu0 %304
      %v307 = vld [vmem:[%s280] sm:$0xff]
      %v309 = vcombine.high %v307, %v307
      %vm310 = vcmask 31744
      %v312 = vsel %vm310, %v293, 0
      %vm314 = vcmask 1043456
      %v315 = vsel %vm314, %v307, 0
      %v317 = vsel %vm314, %v309, 0
      %319 = vmatprep.subr.mxu0 %v317
      %320 = vmatpush1.msra.mxu0 %v315
      %321 = vmatprep.subr.mxu0 0.0
      %322 = vmatpush1.msra.mxu0 0.0
      %323 = vmatprep.subr.mxu0 0.0
      %324 = vmatpush1.msra.mxu0 0.0
      %325 = vmatprep.subr.mxu0 0.0
      %326 = vmatpush1.msra.mxu0 0.0
      %327 = vmatprep.subr.mxu0 0.0
      %328 = vmatpush1.msra.mxu0 0.0
      %329 = vmatprep.subr.mxu0 0.0
      %330 = vmatpush1.msra.mxu0 0.0
      %331 = vmatprep.subr.mxu0 0.0
      %332 = vmatpush1.msra.mxu0 0.0
      %333 = vmatprep.subr.mxu0 0.0
      %334 = vmatpush1.msra.mxu0 0.0
      %335 = vmatprep.subr.mxu0 0.0
      %336 = vmatpush1.msra.mxu0 0.0
      %337 = vmatprep.subr.mxu0 0.0
      %338 = vmatpush1.msra.mxu0 0.0
      %339 = vmatprep.subr.mxu0 0.0
      %340 = vmatpush1.msra.mxu0 0.0
      %341 = vmatprep.subr.mxu0 0.0
      %342 = vmatpush1.msra.mxu0 0.0
      %343 = vmatprep.subr.mxu0 0.0
      %344 = vmatpush1.msra.mxu0 0.0
      %345 = vmatprep.subr.mxu0 0.0
      %346 = vmatpush1.msra.mxu0 0.0
      %347 = vmatprep.subr.mxu0 0.0
      %348 = vmatpush1.msra.mxu0 0.0
      %349 = vmatprep.subr.mxu0 0.0
      %350 = vmatpush1.msra.mxu0 0.0
      %351 = vmatprep.subr.mxu0 0.0
      %352 = vmatpush1.msra.mxu0 0.0
      %353 = vmatprep.subr.mxu0 0.0
      %354 = vmatpush1.msra.mxu0 0.0
      %355 = vmatprep.subr.mxu0 0.0
      %356 = vmatpush1.msra.mxu0 0.0
      %357 = vmatprep.subr.mxu0 0.0
      %358 = vmatpush1.msra.mxu0 0.0
      %359 = vmatprep.subr.mxu0 0.0
      %360 = vmatpush1.msra.mxu0 0.0
      %361 = vmatprep.subr.mxu0 0.0
      %362 = vmatpush1.msra.mxu0 0.0
      %363 = vmatprep.subr.mxu0 0.0
      %364 = vmatpush1.msra.mxu0 0.0
      %365 = vmatprep.subr.mxu0 0.0
      %366 = vmatpush1.msra.mxu0 0.0
      %367 = vmatprep.subr.mxu0 0.0
      %368 = vmatpush1.msra.mxu0 0.0
      %369 = vmatprep.subr.mxu0 0.0
      %370 = vmatpush1.msra.mxu0 0.0
      %371 = vmatprep.subr.mxu0 0.0
      %372 = vmatpush1.msra.mxu0 0.0
      %373 = vmatprep.subr.mxu0 0.0
      %374 = vmatpush1.msra.mxu0 0.0
      %375 = vmatprep.subr.mxu0 0.0
      %376 = vmatpush1.msra.mxu0 0.0
      %377 = vmatprep.subr.mxu0 0.0
      %378 = vmatpush1.msra.mxu0 0.0
      %379 = vmatprep.subr.mxu0 0.0
      %380 = vmatpush1.msra.mxu0 0.0
      %381 = vmatprep.subr.mxu0 0.0
      %382 = vmatpush1.msra.mxu0 0.0
      %383 = vmatprep.mubr.f32.mxu0 0.0
      %384 = vmatmul.mubr.f32.gmra.mrb[0].mxu0 %v312
      %v385 = vpop.f32.mrb[0].mxu0
      %v386 = vadd.f32 %v299, %v385
      %v387 = vpop.f32.mrb[0].mxu0
      %v388 = vadd.f32 %v299, %v387
      %389 = vdwg.mxu0
      %vm390 = vcmp.gt.f32.partialorder %v386, 0.0
      %vm391 = vcmp.gt.f32.partialorder %v388, 0.0
      %v392 = vstv %s292
      %v393 = vmul.f32 %v392, %v386
      %v394 = vmul.f32 %v392, %v388
      %v395 = vsel %vm390, %v386, %v393
      %v396 = vsel %vm391, %v388, %v394
      %vm397 = vcmask 64512
      %v399 = vsel %vm397, %v294, 0
      %401 = vmatprep.subr.mxu0 %v396
      %402 = vmatpush1.msra.mxu0 %v395
      %403 = vmatprep.subr.mxu0 0.0
      %404 = vmatpush1.msra.mxu0 0.0
      %405 = vmatprep.subr.mxu0 0.0
      %406 = vmatpush1.msra.mxu0 0.0
      %407 = vmatprep.subr.mxu0 0.0
      %408 = vmatpush1.msra.mxu0 0.0
      %409 = vmatprep.subr.mxu0 0.0
      %410 = vmatpush1.msra.mxu0 0.0
      %411 = vmatprep.subr.mxu0 0.0
      %412 = vmatpush1.msra.mxu0 0.0
      %413 = vmatprep.subr.mxu0 0.0
      %414 = vmatpush1.msra.mxu0 0.0
      %415 = vmatprep.subr.mxu0 0.0
      %416 = vmatpush1.msra.mxu0 0.0
      %417 = vmatprep.subr.mxu0 0.0
      %418 = vmatpush1.msra.mxu0 0.0
      %419 = vmatprep.subr.mxu0 0.0
      %420 = vmatpush1.msra.mxu0 0.0
      %421 = vmatprep.subr.mxu0 0.0
      %422 = vmatpush1.msra.mxu0 0.0
      %423 = vmatprep.subr.mxu0 0.0
      %424 = vmatpush1.msra.mxu0 0.0
      %425 = vmatprep.subr.mxu0 0.0
      %426 = vmatpush1.msra.mxu0 0.0
      %427 = vmatprep.subr.mxu0 0.0
      %428 = vmatpush1.msra.mxu0 0.0
      %429 = vmatprep.subr.mxu0 0.0
      %430 = vmatpush1.msra.mxu0 0.0
      %431 = vmatprep.subr.mxu0 0.0
      %432 = vmatpush1.msra.mxu0 0.0
      %433 = vmatprep.subr.mxu0 0.0
      %434 = vmatpush1.msra.mxu0 0.0
      %435 = vmatprep.subr.mxu0 0.0
      %436 = vmatpush1.msra.mxu0 0.0
      %437 = vmatprep.subr.mxu0 0.0
      %438 = vmatpush1.msra.mxu0 0.0
      %439 = vmatprep.subr.mxu0 0.0
      %440 = vmatpush1.msra.mxu0 0.0
      %441 = vmatprep.subr.mxu0 0.0
      %442 = vmatpush1.msra.mxu0 0.0
      %443 = vmatprep.subr.mxu0 0.0
      %444 = vmatpush1.msra.mxu0 0.0
      %445 = vmatprep.subr.mxu0 0.0
      %446 = vmatpush1.msra.mxu0 0.0
      %447 = vmatprep.subr.mxu0 0.0
      %448 = vmatpush1.msra.mxu0 0.0
      %449 = vmatprep.subr.mxu0 0.0
      %450 = vmatpush1.msra.mxu0 0.0
      %451 = vmatprep.subr.mxu0 0.0
      %452 = vmatpush1.msra.mxu0 0.0
      %453 = vmatprep.subr.mxu0 0.0
      %454 = vmatpush1.msra.mxu0 0.0
      %455 = vmatprep.subr.mxu0 0.0
      %456 = vmatpush1.msra.mxu0 0.0
      %457 = vmatprep.subr.mxu0 0.0
      %458 = vmatpush1.msra.mxu0 0.0
      %459 = vmatprep.subr.mxu0 0.0
      %460 = vmatpush1.msra.mxu0 0.0
      %461 = vmatprep.subr.mxu0 0.0
      %462 = vmatpush1.msra.mxu0 0.0
      %463 = vmatprep.subr.mxu0 0.0
      %464 = vmatpush1.msra.mxu0 0.0
      %465 = vmatprep.mubr.f32.mxu0 0.0
      %466 = vmatmul.mubr.f32.gmra.mrb[0].mxu0 %v399
      %v467 = vpop.f32.mrb[0].mxu0
      %v468 = vadd.f32 %v305, %v467
      %v469 = vpop.f32.mrb[0].mxu0
      %v470 = vadd.f32 %v305, %v469
      %471 = vdwg.mxu0
      %v474 = vcombine.low %v468, %v470
      %476 = vst [vmem:[%s290] sm:$0xff] %v474
      %s477 = smul.u32 2, %s23
      %p478 = scmp.lt.s32.totalorder %s22, 1
      %s479 = scalar_select %p478, %s22, 1
      %p480 = scmp.lt.s32.totalorder %s477, 1
      %s481 = scalar_select %p480, %s477, 1
      %s482 = smul.addr %s479, 2
      %s483 = sadd.s32 %s481, %s482
      %s484 = smul.addr %s483, 4
      %s485 = scalar_lea.vmem %s6, %s484
      // Predicated region
      $region45: #{mlp_forward.1} parent=43 // pred_check
        %p486 = pneg %p183
      $region46: #{mlp_forward.1} parent=43 // pred_check_branch
        %488 = sbr.rel (%p486) target = $region48
      $region47: #{mlp_forward.1} parent=43 // pred_region
        %s489 = smul.u32 2, %s23
      $region48: #{mlp_forward.1} parent=43 // pred_fallthru
        _
    $region44: #{mlp_forward.1} parent=5 // pred_fallthru
      _
    %p490 = scmp.le.s32.totalorder 2, %s13
    // Predicated region
    $region49: #{mlp_forward.1} parent=5 // pred_check
      %p491 = pneg %p490
    $region50: #{mlp_forward.1} parent=5 // pred_check_branch
      %493 = sbr.rel (%p491) target = $region52
    $region51: #{mlp_forward.1} parent=5 // pred_region
      %s494 = ssub.s32 %s13, 2
      // Predicated region
      $region53: #{mlp_forward.1} parent=51 // pred_check
        %p495 = pneg %p189
      $region54: #{mlp_forward.1} parent=51 // pred_check_branch
        %497 = sbr.rel (%p495) target = $region56
      $region55: #{mlp_forward.1} parent=51 // pred_region
        %s498 = smul.u32 2, %s25
        %p499 = scmp.lt.s32.totalorder %s24, 1
        %s500 = scalar_select %p499, %s24, 1
        %p501 = scmp.lt.s32.totalorder %s498, 1
        %s502 = scalar_select %p501, %s498, 1
        %s503 = smul.addr %s500, 2
        %s504 = sadd.s32 %s502, %s503
        %s505 = smul.addr %s504, 4
        %s506 = scalar_lea.vmem %s6, %s505
      $region56: #{mlp_forward.1} parent=51 // pred_fallthru
        _
    $region52: #{mlp_forward.1} parent=5 // pred_fallthru
      _
  $region6: #{mlp_forward.1} parent=0 // loop_footer
    %s17 = sadd.s32 1, %s13
  $region7: #{mlp_forward.1} parent=0 // loop_footer_branch
    %12 = sbr.rel target = $region3
  $region8: #{mlp_forward.1} parent=0 // loop_exit
    _

</llo_original>
